<compile_context>
chip_gen: v5e
topology: v5e:2x2
jax: 0.10.0
libtpu: 0.0.40
codegen_flags: <defaults>
</compile_context>

<pallas_src>
import jax
import jax.numpy as jnp
from jax.experimental import pallas as pl
from jax.experimental.pallas import tpu as pltpu


def attention_identity(x: jax.Array) -> jax.Array:
    """Attention(name=None).forward == nn.Identity: return the input as-is."""
    return x


# ---------------------------------------------------------------------------
# Materialized identity: HBM -> HBM DMA copy into a fresh output buffer.
# ---------------------------------------------------------------------------

_MIN_CHUNKED_BYTES = 4 << 20     # below this, one whole-array DMA wins outright
_TARGET_CHUNK_BYTES = 4 << 20    # aim for ~4 MiB per DMA descriptor


def _pick_chunking(total_elems: int, itemsize: int):
    """Pick (n_outer, n_inner) grid for the pipelined copy, or None.

    Chunking is keyed off BYTES (not x.shape[0]): we want enough ~4 MiB chunks
    to keep two DMAs in flight per core, an even total so the two v7x
    TensorCores get a balanced share, and no chunking at all for small arrays
    where per-DMA overhead would dominate the transfer itself.
    """
    total_bytes = total_elems * itemsize
    if total_bytes < _MIN_CHUNKED_BYTES:
        return None
    target = max(4, pl.cdiv(total_bytes, _TARGET_CHUNK_BYTES))
    if target % 2:
        target += 1
    # Even chunk counts, nearest to `target` first. The window is tiny, so this
    # costs nothing at trace time.
    candidates = []
    for d in range(0, 4 * target, 2):
        if target + d <= total_elems:
            candidates.append(target + d)
        if d > 0 and target - d >= 4:
            candidates.append(target - d)
    for n in candidates:
        if total_elems % n == 0:
            return 2, n // 2          # outer=2 -> one shard per v7x TensorCore
    # No suitable even divisor (odd / prime-ish element counts): a single
    # whole-array DMA is still near the HBM roofline, so just use it.
    return None


def _copy_whole_kernel(x_hbm, o_hbm, sem):
    # One whole-array HBM->HBM DMA; no VMEM staging, no TensorCore work.
    cp = pltpu.make_async_copy(x_hbm, o_hbm, sem)
    cp.start()
    cp.wait()


def _copy_chunks_kernel(x_hbm, o_hbm, sems):
    """Pipelined HBM->HBM chunk copy: up to two DMAs in flight per core.

    Grid = (n_outer, n_inner). The outer ("parallel") axis shards chunks across
    the two v7x TensorCores (pure sequential loop on v5e/v6e). Along the inner
    ("arbitrary") axis, step ci starts chunk ci's DMA, retires chunk ci-1
    (issued one step earlier), and at the last step also retires chunk ci
    itself -- DMA issue latency hides behind the previous transfer instead of
    serialising with it. Semaphores are indexed [outer, ci % 2] so the two
    cores never touch the same slot.
    """
    oi = pl.program_id(0)
    ci = pl.program_id(1)
    n_inner = pl.num_programs(1)

    def chunk_copy(idx):
        return pltpu.make_async_copy(
            x_hbm.at[oi, idx], o_hbm.at[oi, idx], sems.at[oi, idx % 2])

    chunk_copy(ci).start()            # issue this chunk's DMA immediately

    @pl.when(ci > 0)                  # retire the chunk issued one step ago
    def _():
        chunk_copy(ci - 1).wait()

    @pl.when(ci == n_inner - 1)       # tail: retire the final in-flight DMA
    def _():
        chunk_copy(ci).wait()


def attention_identity_materialized(x: jax.Array) -> jax.Array:
    """Identity that materializes a distinct output buffer via HBM->HBM DMA.

    NOTE: plain XLA (jnp.copy, or fusing the copy into a neighbouring op) is
    already roofline-optimal for a bare copy; use this path only when a Pallas
    custom call is specifically required by the caller.
    """
    if x.size == 0:
        return x

    nbytes = x.size * x.dtype.itemsize
    cost = pl.CostEstimate(flops=0, transcendentals=0, bytes_accessed=2 * nbytes)

    chunking = _pick_chunking(x.size, x.dtype.itemsize)

    if chunking is None:
        # Small / awkwardly-sized arrays: one whole-array DMA, no grid at all.
        return pl.pallas_call(
            _copy_whole_kernel,
            out_shape=jax.ShapeDtypeStruct(x.shape, x.dtype),
            in_specs=[pl.BlockSpec(memory_space=pl.ANY)],    # raw HBM ref
            out_specs=pl.BlockSpec(memory_space=pl.ANY),     # raw HBM ref
            scratch_shapes=[pltpu.SemaphoreType.DMA(())],
            cost_estimate=cost,
        )(x)

    n_outer, n_inner = chunking
    chunk_elems = x.size // (n_outer * n_inner)
    # Contiguous row-major reshape: no data movement (unlike pad/concatenate).
    x_chunks = x.reshape(n_outer, n_inner, chunk_elems)

    out = pl.pallas_call(
        _copy_chunks_kernel,
        out_shape=jax.ShapeDtypeStruct(x_chunks.shape, x.dtype),
        grid_spec=pltpu.PrefetchScalarGridSpec(
            num_scalar_prefetch=0,
            grid=(n_outer, n_inner),
            in_specs=[pl.BlockSpec(memory_space=pl.ANY)],    # raw HBM ref
            out_specs=pl.BlockSpec(memory_space=pl.ANY),     # raw HBM ref
            scratch_shapes=[pltpu.SemaphoreType.DMA((2, 2))],
        ),
        compiler_params=pltpu.CompilerParams(
            dimension_semantics=("parallel", "arbitrary"),   # megacore on v7x
        ),
        cost_estimate=cost,
    )(x_chunks)
    return out.reshape(x.shape)


if __name__ == "__main__":
    key = jax.random.PRNGKey(0)
    k1, k2 = jax.random.split(key)

    # Small NCHW U-Net++ feature map (8 KiB): exercises the single-DMA path.
    x_small = jax.random.normal(k1, (2, 4, 16, 16), dtype=jnp.float32)

    # Production path: pure identity, zero data movement (no kernel launched).
    y_fast = attention_identity(x_small)
    assert y_fast is x_small

    y_small = jax.block_until_ready(attention_identity_materialized(x_small))
    assert y_small.shape == x_small.shape and y_small.dtype == x_small.dtype
    assert bool(jnp.all(y_small == x_small))

    # Larger feature map (16 MiB): exercises the chunked, pipelined-DMA path
    # (4 chunks of 4 MiB, grid (2, 2), two DMAs in flight per core).
    x_big = jax.random.normal(k2, (8, 32, 128, 128), dtype=jnp.float32)
    y_big = jax.block_until_ready(attention_identity_materialized(x_big))
    assert y_big.shape == x_big.shape and y_big.dtype == x_big.dtype
    assert bool(jnp.all(y_big == x_big))

    print("KERNEL_OK")
</pallas_src>

<mosaic_0001>
module attributes {stable_mosaic.version = 11 : i64} {
  func.func @_copy_whole_kernel(%arg0: memref<2x4x16x16xf32, #tpu.memory_space<any>>, %arg1: memref<2x4x16x16xf32, #tpu.memory_space<any>>, %arg2: memref<!tpu.dma_semaphore, #tpu.memory_space<semaphore_mem>>) attributes {dimension_semantics = [], scalar_prefetch = 0 : i64, scratch_operands = 1 : i64, tpu.core_type = #tpu.core_type<tc>} {
    tpu.enqueue_dma source(%arg0 : memref<2x4x16x16xf32, #tpu.memory_space<any>>) target(%arg1 : memref<2x4x16x16xf32, #tpu.memory_space<any>>) target_semaphore(%arg2 : memref<!tpu.dma_semaphore, #tpu.memory_space<semaphore_mem>>)
    tpu.wait_dma2 semaphore(%arg2 : memref<!tpu.dma_semaphore, #tpu.memory_space<semaphore_mem>>) src(%arg0 : memref<2x4x16x16xf32, #tpu.memory_space<any>>) dst(%arg1 : memref<2x4x16x16xf32, #tpu.memory_space<any>>)
    return
  }
}

</mosaic_0001>

<llo_original>
// kernel: tpu_custom_call.1
$region0: #{tpu_custom_call.1}
  #allocation0 [shape = 'u32[]', space=smem, size = 0x4, offset = 0x4, fixed_abs, tag = 'smem constant byte address 0x4 - core index']
  #allocation1 [shape = 'u32[72,128]{1,0:T(1,128)}', space=vmem, size = 0x9000, scoped, tag = 'internal scratch']
  #allocation2 [shape = 's32[1]{0}', space=sflag, size = 0x4, scoped, tag = 'scratch operand']
  #allocation3 [shape = 's32[]', space=sflag, size = 0x4, offset = 0, fixed_abs, tag = 'sflag constant byte address 0x0 - dummy sync flag']
  #allocation4 [shape = 'u32[0]{0}', space=smem, size = 0, offset = 0, fixed_abs, tag = 'smem constant byte address 0x0 - null']
  %s0 = inlined_call_operand.hbm [shape: f32[2,4,16,16], index: 0, kind: input, shape index: {}]
  %s1 = inlined_call_operand.hbm [shape: f32[2,4,16,16], index: 1, kind: output, shape index: {}]
  %s2 = sld [smem:[#allocation0]]
  $region2: #{tpu_custom_call.1} parent=0
    _
  %s4 = ssub.s32 1, %s2
  %s5 = scalar_select 0, %s4, %s2
  %s7 = sshll.u32 1, 14
  %s8 = sxor.u32 4294967295, %s7
  %s10 = sshll.u32 %s0, 4
  %s11 = int_to_ptr.hbm [resolvable:$true] %s10
  %s12 = sshll.u32 %s1, 4
  %s13 = int_to_ptr.hbm [resolvable:$true] %s12
  %16 = dma.general %s11, 2048, %s13, [#allocation2], [#allocation3], [#allocation4], 0, 0
  %s17 = smul.u32 2, 4
  %s18 = smul.u32 %s17, 16
  %s19 = smul.u32 %s18, 1
  %s20 = sshll.u32 %s19, 4
  %21 = dma.done [#allocation2], %s20
  %22 = vsyncmov [#allocation2]
  %s23 = vpop.sfrf %22
  %p24 = scmp.eq.s32.totalorder %s23, 0
  %p25 = pneg %p24
  %27 = shalt.err (%p25)

</llo_original>
